<compile_context>
chip_gen: v5e
topology: v5e:2x2
jax: 0.10.0
libtpu: 0.0.40
codegen_flags: <defaults>
</compile_context>

<pallas_src>
from functools import partial

import jax
import jax.numpy as jnp
from jax import lax
from jax.experimental import pallas as pl
from jax.experimental.pallas import tpu as pltpu


# ------------------------------ fused forward kernel ------------------------------
def fused_caption_kernel(src_ref, whc_ref, bhc_ref, xseq_ref, tgt_ref,
                         wx_ref, wh_ref, b4_ref, wd_ref, bd_ref,
                         out_ref, gx_buf, hs_buf, *, steps, batch):
    H = wh_ref.shape[0]
    B = batch
    S = steps

    # ---- init_hidden: single fused matmul producing [h0 | c0] ----
    hc = jnp.tanh(jnp.dot(src_ref[...], whc_ref[...],
                          preferred_element_type=jnp.float32) + bhc_ref[...])   # (B, 2H)
    h = hc[:, :H]
    c = hc[:, H:]

    # ---- x-side gates for ALL steps in ONE MXU op (off the serial h->h chain) ----
    gx_buf[...] = (jnp.dot(xseq_ref[...], wx_ref[...],
                           preferred_element_type=jnp.float32) + b4_ref[...])   # (SB_pad, 4H)

    # Zero-init the hidden-state buffer so padded rows stay finite in the epilogue.
    hs_buf[...] = jnp.zeros_like(hs_buf)

    wh = wh_ref[...]                 # (H, 4H) resident for the whole loop

    # Fully unrolled serial time loop: one h @ wh push + elementwise per step.
    for t in range(S):
        gates = gx_buf[t * B:(t + 1) * B, :] + jnp.dot(
            h, wh, preferred_element_type=jnp.float32)                          # (B, 4H)
        # Nonlinearities evaluated once on the full 4H=128-lane vreg (EUP),
        # then i/f/g/o quadrants sliced (PyTorch gate order [i | f | g | o]).
        sig = jax.nn.sigmoid(gates)
        tg = jnp.tanh(gates)
        i_g = sig[:, 0 * H:1 * H]
        f_g = sig[:, 1 * H:2 * H]
        g_g = tg[:, 2 * H:3 * H]
        o_g = sig[:, 3 * H:4 * H]
        c = f_g * c + i_g * g_g
        h = o_g * jnp.tanh(c)
        hs_buf[t * B:(t + 1) * B, :] = h

    # ---- word_dist + log_softmax + NLLLoss(ignore_index=0), batched over all steps ----
    logits = (jnp.dot(hs_buf[...], wd_ref[...],
                      preferred_element_type=jnp.float32) + bd_ref[...])        # (SB_pad, V)
    m = jnp.max(logits, axis=1, keepdims=True)
    z = logits - m
    lse = jnp.log(jnp.sum(jnp.exp(z), axis=1, keepdims=True))
    logp = z - lse                                                               # (SB_pad, V)

    tgt = tgt_ref[...]                                                           # (SB_pad, 1)
    col = lax.broadcasted_iota(jnp.int32, logp.shape, 1)
    picked = jnp.sum(jnp.where(col == tgt, logp, 0.0), axis=1, keepdims=True)    # (SB_pad, 1)
    valid = (tgt != 0)
    loss_sum = jnp.sum(jnp.where(valid, -picked, 0.0), axis=0, keepdims=True)    # (1, 1)
    cnt = jnp.sum(valid.astype(jnp.float32), axis=0, keepdims=True)              # (1, 1)
    # NOTE: cnt == 0 (all-padding batch) yields NaN, matching PyTorch NLLLoss.
    out_ref[...] = jnp.concatenate([loss_sum / cnt, cnt], axis=1)                # (1, 2)


# --------------------------------- parameters -------------------------------------
def make_params(key, vocab, txt_in, img_in, txt_h):
    ks = jax.random.split(key, 10)
    s = 0.1
    embed = s * jax.random.normal(ks[0], (vocab, txt_in), jnp.float32)
    embed = embed.at[0].set(0.0)                               # padding_idx=0
    Wh = s * jax.random.normal(ks[1], (txt_h, img_in), jnp.float32)   # hidden_fc
    bh = s * jax.random.normal(ks[2], (txt_h,), jnp.float32)
    Wc = s * jax.random.normal(ks[3], (txt_h, img_in), jnp.float32)   # cell_fc
    bc = s * jax.random.normal(ks[4], (txt_h,), jnp.float32)
    Wih = s * jax.random.normal(ks[5], (4 * txt_h, txt_in), jnp.float32)
    Whh = s * jax.random.normal(ks[6], (4 * txt_h, txt_h), jnp.float32)
    bih = s * jax.random.normal(ks[7], (4 * txt_h,), jnp.float32)
    bhh = s * jax.random.normal(ks[8], (4 * txt_h,), jnp.float32)
    Wd = s * jax.random.normal(ks[9], (vocab, txt_h), jnp.float32)     # word_dist
    bd = jnp.zeros((vocab,), jnp.float32)
    return dict(embed=embed, Wh=Wh, bh=bh, Wc=Wc, bc=bc,
                Wih=Wih, Whh=Whh, bih=bih, bhh=bhh, Wd=Wd, bd=bd)


def prepare_fused_params(params):
    """One-time weight layout fusion/transposition (hoisted out of the forward path)."""
    return dict(
        whc_t=jnp.concatenate([params['Wh'].T, params['Wc'].T], axis=1),   # (img_in, 2H)
        bhc=jnp.concatenate([params['bh'], params['bc']])[None, :],        # (1, 2H)
        embed=params['embed'],                                             # (V, I) -- wrapper gather
        wx=params['Wih'].T,                                                # (I, 4H)  [i|f|g|o]
        wh=params['Whh'].T,                                                # (H, 4H)
        b4=(params['bih'] + params['bhh'])[None, :],                       # (1, 4H)
        wd_t=params['Wd'].T,                                               # (H, V)
        bd=params['bd'][None, :],                                          # (1, V)
    )


# ----------------------------------- wrapper ---------------------------------------
def _round_up(x, m):
    return ((x + m - 1) // m) * m


@jax.jit
def baseline_forward(fused, src, tgt):
    B, T = tgt.shape
    S = T - 1
    H = fused['wh'].shape[0]
    SB = S * B
    SB_pad = _round_up(SB, 8)

    tgt_i32 = tgt.astype(jnp.int32)
    # Time-major decoder inputs (tokens 0..T-2) and targets (tokens 1..T-1).
    tok_in = jnp.transpose(tgt_i32[:, :S], (1, 0)).reshape(SB)                  # (S*B,)
    x_seq = jnp.take(fused['embed'], tok_in, axis=0)                            # (S*B, I)
    x_seq = jnp.pad(x_seq, ((0, SB_pad - SB), (0, 0)))                          # pad rows = 0
    tgt_out = jnp.transpose(tgt_i32[:, 1:], (1, 0)).reshape(SB, 1)
    tgt_out = jnp.pad(tgt_out, ((0, SB_pad - SB), (0, 0)))                      # pad rows -> id 0

    kernel = partial(fused_caption_kernel, steps=S, batch=B)
    vmem_spec = lambda: pl.BlockSpec(memory_space=pltpu.MemorySpace.VMEM)

    out = pl.pallas_call(
        kernel,
        out_shape=jax.ShapeDtypeStruct((1, 2), jnp.float32),
        in_specs=[vmem_spec() for _ in range(10)],
        out_specs=vmem_spec(),
        scratch_shapes=[pltpu.VMEM((SB_pad, 4 * H), jnp.float32),   # hoisted x-side gates
                        pltpu.VMEM((SB_pad, H), jnp.float32)],      # per-step hidden states
    )(src, fused['whc_t'], fused['bhc'], x_seq, tgt_out,
      fused['wx'], fused['wh'], fused['b4'], fused['wd_t'], fused['bd'])

    return out[0, 0], out[0, 1].astype(jnp.int32)


# ------------------------------ pure-JAX reference ----------------------------------
def reference_forward(params, src, tgt):
    T = tgt.shape[1]
    h = jnp.tanh(src @ params['Wh'].T + params['bh'])
    c = jnp.tanh(src @ params['Wc'].T + params['bc'])
    emb = params['embed'][tgt]
    xs = jnp.transpose(emb[:, :T - 1, :], (1, 0, 2))

    def step(carry, x_t):
        h, c = carry
        gates = (x_t @ params['Wih'].T + params['bih']
                 + h @ params['Whh'].T + params['bhh'])
        i, f, g, o = jnp.split(gates, 4, axis=1)
        i, f, o = jax.nn.sigmoid(i), jax.nn.sigmoid(f), jax.nn.sigmoid(o)
        g = jnp.tanh(g)
        c = f * c + i * g
        h = o * jnp.tanh(c)
        return (h, c), h

    _, outs = lax.scan(step, (h, c), xs)                        # (T-1, B, H)
    logits = outs @ params['Wd'].T + params['bd']
    logp = jax.nn.log_softmax(logits, axis=-1)
    tgt_tm = jnp.transpose(tgt[:, 1:], (1, 0))
    picked = jnp.take_along_axis(logp, tgt_tm[..., None], axis=-1)[..., 0]
    mask = (tgt_tm != 0).astype(jnp.float32)
    loss = -jnp.sum(picked * mask) / jnp.sum(mask)
    return loss, jnp.sum(mask).astype(jnp.int32)


if __name__ == "__main__":
    B, T = 4, 8                       # batch, padded target length
    TXT_IN, IMG_IN, TXT_H, VOCAB = 16, 16, 32, 40   # img_hidden_size == img_input_size
    key = jax.random.PRNGKey(0)
    kp, ks, kt = jax.random.split(key, 3)
    params = make_params(kp, VOCAB, TXT_IN, IMG_IN, TXT_H)
    fused = prepare_fused_params(params)            # one-time layout prep

    src = jax.random.normal(ks, (B, IMG_IN), jnp.float32)
    tgt = jax.random.randint(kt, (B, T), 1, VOCAB).astype(jnp.int32)
    lengths = jnp.array([T, T - 2, T - 3, T - 5])
    pos = jnp.arange(T)[None, :]
    tgt = jnp.where(pos < lengths[:, None], tgt, 0).astype(jnp.int32)  # 0-padded

    loss, num_words = baseline_forward(fused, src, tgt)
    loss = jax.block_until_ready(loss)
    num_words = jax.block_until_ready(num_words)

    ref_loss, ref_num = reference_forward(params, src, tgt)
    assert jnp.allclose(loss, ref_loss, atol=2e-3, rtol=2e-3), (loss, ref_loss)
    assert int(num_words) == int(ref_num), (num_words, ref_num)
    print("KERNEL_OK")
</pallas_src>

<mosaic_0001>
module attributes {stable_mosaic.version = 11 : i64} {
  func.func @fused_caption_kernel(%arg0: memref<4x16xf32, #tpu.memory_space<vmem>>, %arg1: memref<16x64xf32, #tpu.memory_space<vmem>>, %arg2: memref<1x64xf32, #tpu.memory_space<vmem>>, %arg3: memref<32x16xf32, #tpu.memory_space<vmem>>, %arg4: memref<32x1xi32, #tpu.memory_space<vmem>>, %arg5: memref<16x128xf32, #tpu.memory_space<vmem>>, %arg6: memref<32x128xf32, #tpu.memory_space<vmem>>, %arg7: memref<1x128xf32, #tpu.memory_space<vmem>>, %arg8: memref<32x40xf32, #tpu.memory_space<vmem>>, %arg9: memref<1x40xf32, #tpu.memory_space<vmem>>, %arg10: memref<1x2xf32, #tpu.memory_space<vmem>>, %arg11: memref<32x128xf32, #tpu.memory_space<vmem>>, %arg12: memref<32x32xf32, #tpu.memory_space<vmem>>) attributes {dimension_semantics = [], scalar_prefetch = 0 : i64, scratch_operands = 2 : i64, tpu.core_type = #tpu.core_type<tc>} {
    %c0 = arith.constant 0 : index
    %c0_0 = arith.constant 0 : index
    %0 = vector.load %arg0[%c0, %c0_0] : memref<4x16xf32, #tpu.memory_space<vmem>>, vector<4x16xf32>
    %c0_1 = arith.constant 0 : index
    %c0_2 = arith.constant 0 : index
    %1 = vector.load %arg1[%c0_1, %c0_2] : memref<16x64xf32, #tpu.memory_space<vmem>>, vector<16x64xf32>
    %cst = arith.constant dense<0.000000e+00> : vector<4x64xf32>
    %2 = tpu.matmul %0, %1, %cst {dimension_numbers = #tpu.dot_dimension_numbers<[1], [0], [0], [1], [0, 0, 1, 1], [], []>} : vector<4x16xf32>, vector<16x64xf32>, vector<4x64xf32> -> vector<4x64xf32>
    %c0_3 = arith.constant 0 : index
    %c0_4 = arith.constant 0 : index
    %3 = vector.load %arg2[%c0_3, %c0_4] : memref<1x64xf32, #tpu.memory_space<vmem>>, vector<1x64xf32>
    %4 = vector.broadcast %3 : vector<1x64xf32> to vector<4x64xf32>
    %5 = arith.addf %2, %4 : vector<4x64xf32>
    %6 = math.tanh %5 : vector<4x64xf32>
    %7 = vector.extract_strided_slice %6 {offsets = [0, 0], sizes = [4, 32], strides = [1, 1]} : vector<4x64xf32> to vector<4x32xf32>
    %8 = vector.extract_strided_slice %6 {offsets = [0, 32], sizes = [4, 32], strides = [1, 1]} : vector<4x64xf32> to vector<4x32xf32>
    %c0_5 = arith.constant 0 : index
    %c0_6 = arith.constant 0 : index
    %9 = vector.load %arg3[%c0_5, %c0_6] : memref<32x16xf32, #tpu.memory_space<vmem>>, vector<32x16xf32>
    %c0_7 = arith.constant 0 : index
    %c0_8 = arith.constant 0 : index
    %10 = vector.load %arg5[%c0_7, %c0_8] : memref<16x128xf32, #tpu.memory_space<vmem>>, vector<16x128xf32>
    %cst_9 = arith.constant dense<0.000000e+00> : vector<32x128xf32>
    %11 = tpu.matmul %9, %10, %cst_9 {dimension_numbers = #tpu.dot_dimension_numbers<[1], [0], [0], [1], [0, 0, 1, 1], [], []>} : vector<32x16xf32>, vector<16x128xf32>, vector<32x128xf32> -> vector<32x128xf32>
    %c0_10 = arith.constant 0 : index
    %c0_11 = arith.constant 0 : index
    %12 = vector.load %arg7[%c0_10, %c0_11] : memref<1x128xf32, #tpu.memory_space<vmem>>, vector<1x128xf32>
    %13 = vector.broadcast %12 : vector<1x128xf32> to vector<32x128xf32>
    %14 = arith.addf %11, %13 : vector<32x128xf32>
    %c0_12 = arith.constant 0 : index
    %c0_13 = arith.constant 0 : index
    %15 = vector.load %arg11[%c0_12, %c0_13] : memref<32x128xf32, #tpu.memory_space<vmem>>, vector<32x128xf32>
    tpu.vector_store %arg11[%c0_12, %c0_13], %14 {strides = array<i32>} : memref<32x128xf32, #tpu.memory_space<vmem>>, vector<32x128xf32>,
    %cst_14 = arith.constant 0.000000e+00 : f32
    %16 = vector.broadcast %cst_14 : f32 to vector<32x32xf32>
    %c0_15 = arith.constant 0 : index
    %c0_16 = arith.constant 0 : index
    %17 = vector.load %arg12[%c0_15, %c0_16] : memref<32x32xf32, #tpu.memory_space<vmem>>, vector<32x32xf32>
    tpu.vector_store %arg12[%c0_15, %c0_16], %16 {strides = array<i32>} : memref<32x32xf32, #tpu.memory_space<vmem>>, vector<32x32xf32>,
    %c0_17 = arith.constant 0 : index
    %c0_18 = arith.constant 0 : index
    %18 = vector.load %arg6[%c0_17, %c0_18] : memref<32x128xf32, #tpu.memory_space<vmem>>, vector<32x128xf32>
    %c0_19 = arith.constant 0 : index
    %c0_20 = arith.constant 0 : index
    %19 = vector.load %arg11[%c0_19, %c0_20] : memref<32x128xf32, #tpu.memory_space<vmem>>, vector<4x128xf32>
    %cst_21 = arith.constant dense<0.000000e+00> : vector<4x128xf32>
    %20 = tpu.matmul %7, %18, %cst_21 {dimension_numbers = #tpu.dot_dimension_numbers<[1], [0], [0], [1], [0, 0, 1, 1], [], []>} : vector<4x32xf32>, vector<32x128xf32>, vector<4x128xf32> -> vector<4x128xf32>
    %21 = arith.addf %19, %20 : vector<4x128xf32>
    %22 = arith.negf %21 : vector<4x128xf32>
    %23 = math.exp %22 : vector<4x128xf32>
    %cst_22 = arith.constant 1.000000e+00 : f32
    %24 = vector.broadcast %cst_22 : f32 to vector<4x128xf32>
    %25 = arith.addf %24, %23 : vector<4x128xf32>
    %26 = arith.divf %24, %25 : vector<4x128xf32>
    %27 = math.tanh %21 : vector<4x128xf32>
    %28 = vector.extract_strided_slice %26 {offsets = [0, 0], sizes = [4, 32], strides = [1, 1]} : vector<4x128xf32> to vector<4x32xf32>
    %29 = vector.extract_strided_slice %26 {offsets = [0, 32], sizes = [4, 32], strides = [1, 1]} : vector<4x128xf32> to vector<4x32xf32>
    %30 = vector.extract_strided_slice %27 {offsets = [0, 64], sizes = [4, 32], strides = [1, 1]} : vector<4x128xf32> to vector<4x32xf32>
    %31 = vector.extract_strided_slice %26 {offsets = [0, 96], sizes = [4, 32], strides = [1, 1]} : vector<4x128xf32> to vector<4x32xf32>
    %32 = arith.mulf %29, %8 : vector<4x32xf32>
    %33 = arith.mulf %28, %30 : vector<4x32xf32>
    %34 = arith.addf %32, %33 : vector<4x32xf32>
    %35 = math.tanh %34 : vector<4x32xf32>
    %36 = arith.mulf %31, %35 : vector<4x32xf32>
    %c0_23 = arith.constant 0 : index
    %c0_24 = arith.constant 0 : index
    %37 = vector.load %arg12[%c0_23, %c0_24] : memref<32x32xf32, #tpu.memory_space<vmem>>, vector<4x32xf32>
    tpu.vector_store %arg12[%c0_23, %c0_24], %36 {strides = array<i32>} : memref<32x32xf32, #tpu.memory_space<vmem>>, vector<4x32xf32>,
    %c4 = arith.constant 4 : index
    %c0_25 = arith.constant 0 : index
    %38 = vector.load %arg11[%c4, %c0_25] : memref<32x128xf32, #tpu.memory_space<vmem>>, vector<4x128xf32>
    %cst_26 = arith.constant dense<0.000000e+00> : vector<4x128xf32>
    %39 = tpu.matmul %36, %18, %cst_26 {dimension_numbers = #tpu.dot_dimension_numbers<[1], [0], [0], [1], [0, 0, 1, 1], [], []>} : vector<4x32xf32>, vector<32x128xf32>, vector<4x128xf32> -> vector<4x128xf32>
    %40 = arith.addf %38, %39 : vector<4x128xf32>
    %41 = arith.negf %40 : vector<4x128xf32>
    %42 = math.exp %41 : vector<4x128xf32>
    %cst_27 = arith.constant 1.000000e+00 : f32
    %43 = vector.broadcast %cst_27 : f32 to vector<4x128xf32>
    %44 = arith.addf %43, %42 : vector<4x128xf32>
    %45 = arith.divf %43, %44 : vector<4x128xf32>
    %46 = math.tanh %40 : vector<4x128xf32>
    %47 = vector.extract_strided_slice %45 {offsets = [0, 0], sizes = [4, 32], strides = [1, 1]} : vector<4x128xf32> to vector<4x32xf32>
    %48 = vector.extract_strided_slice %45 {offsets = [0, 32], sizes = [4, 32], strides = [1, 1]} : vector<4x128xf32> to vector<4x32xf32>
    %49 = vector.extract_strided_slice %46 {offsets = [0, 64], sizes = [4, 32], strides = [1, 1]} : vector<4x128xf32> to vector<4x32xf32>
    %50 = vector.extract_strided_slice %45 {offsets = [0, 96], sizes = [4, 32], strides = [1, 1]} : vector<4x128xf32> to vector<4x32xf32>
    %51 = arith.mulf %48, %34 : vector<4x32xf32>
    %52 = arith.mulf %47, %49 : vector<4x32xf32>
    %53 = arith.addf %51, %52 : vector<4x32xf32>
    %54 = math.tanh %53 : vector<4x32xf32>
    %55 = arith.mulf %50, %54 : vector<4x32xf32>
    %c4_28 = arith.constant 4 : index
    %c0_29 = arith.constant 0 : index
    %56 = vector.load %arg12[%c4_28, %c0_29] : memref<32x32xf32, #tpu.memory_space<vmem>>, vector<4x32xf32>
    tpu.vector_store %arg12[%c4_28, %c0_29], %55 {strides = array<i32>} : memref<32x32xf32, #tpu.memory_space<vmem>>, vector<4x32xf32>,
    %c8 = arith.constant 8 : index
    %c0_30 = arith.constant 0 : index
    %57 = vector.load %arg11[%c8, %c0_30] : memref<32x128xf32, #tpu.memory_space<vmem>>, vector<4x128xf32>
    %cst_31 = arith.constant dense<0.000000e+00> : vector<4x128xf32>
    %58 = tpu.matmul %55, %18, %cst_31 {dimension_numbers = #tpu.dot_dimension_numbers<[1], [0], [0], [1], [0, 0, 1, 1], [], []>} : vector<4x32xf32>, vector<32x128xf32>, vector<4x128xf32> -> vector<4x128xf32>
    %59 = arith.addf %57, %58 : vector<4x128xf32>
    %60 = arith.negf %59 : vector<4x128xf32>
    %61 = math.exp %60 : vector<4x128xf32>
    %cst_32 = arith.constant 1.000000e+00 : f32
    %62 = vector.broadcast %cst_32 : f32 to vector<4x128xf32>
    %63 = arith.addf %62, %61 : vector<4x128xf32>
    %64 = arith.divf %62, %63 : vector<4x128xf32>
    %65 = math.tanh %59 : vector<4x128xf32>
    %66 = vector.extract_strided_slice %64 {offsets = [0, 0], sizes = [4, 32], strides = [1, 1]} : vector<4x128xf32> to vector<4x32xf32>
    %67 = vector.extract_strided_slice %64 {offsets = [0, 32], sizes = [4, 32], strides = [1, 1]} : vector<4x128xf32> to vector<4x32xf32>
    %68 = vector.extract_strided_slice %65 {offsets = [0, 64], sizes = [4, 32], strides = [1, 1]} : vector<4x128xf32> to vector<4x32xf32>
    %69 = vector.extract_strided_slice %64 {offsets = [0, 96], sizes = [4, 32], strides = [1, 1]} : vector<4x128xf32> to vector<4x32xf32>
    %70 = arith.mulf %67, %53 : vector<4x32xf32>
    %71 = arith.mulf %66, %68 : vector<4x32xf32>
    %72 = arith.addf %70, %71 : vector<4x32xf32>
    %73 = math.tanh %72 : vector<4x32xf32>
    %74 = arith.mulf %69, %73 : vector<4x32xf32>
    %c8_33 = arith.constant 8 : index
    %c0_34 = arith.constant 0 : index
    %75 = vector.load %arg12[%c8_33, %c0_34] : memref<32x32xf32, #tpu.memory_space<vmem>>, vector<4x32xf32>
    tpu.vector_store %arg12[%c8_33, %c0_34], %74 {strides = array<i32>} : memref<32x32xf32, #tpu.memory_space<vmem>>, vector<4x32xf32>,
    %c12 = arith.constant 12 : index
    %c0_35 = arith.constant 0 : index
    %76 = vector.load %arg11[%c12, %c0_35] : memref<32x128xf32, #tpu.memory_space<vmem>>, vector<4x128xf32>
    %cst_36 = arith.constant dense<0.000000e+00> : vector<4x128xf32>
    %77 = tpu.matmul %74, %18, %cst_36 {dimension_numbers = #tpu.dot_dimension_numbers<[1], [0], [0], [1], [0, 0, 1, 1], [], []>} : vector<4x32xf32>, vector<32x128xf32>, vector<4x128xf32> -> vector<4x128xf32>
    %78 = arith.addf %76, %77 : vector<4x128xf32>
    %79 = arith.negf %78 : vector<4x128xf32>
    %80 = math.exp %79 : vector<4x128xf32>
    %cst_37 = arith.constant 1.000000e+00 : f32
    %81 = vector.broadcast %cst_37 : f32 to vector<4x128xf32>
    %82 = arith.addf %81, %80 : vector<4x128xf32>
    %83 = arith.divf %81, %82 : vector<4x128xf32>
    %84 = math.tanh %78 : vector<4x128xf32>
    %85 = vector.extract_strided_slice %83 {offsets = [0, 0], sizes = [4, 32], strides = [1, 1]} : vector<4x128xf32> to vector<4x32xf32>
    %86 = vector.extract_strided_slice %83 {offsets = [0, 32], sizes = [4, 32], strides = [1, 1]} : vector<4x128xf32> to vector<4x32xf32>
    %87 = vector.extract_strided_slice %84 {offsets = [0, 64], sizes = [4, 32], strides = [1, 1]} : vector<4x128xf32> to vector<4x32xf32>
    %88 = vector.extract_strided_slice %83 {offsets = [0, 96], sizes = [4, 32], strides = [1, 1]} : vector<4x128xf32> to vector<4x32xf32>
    %89 = arith.mulf %86, %72 : vector<4x32xf32>
    %90 = arith.mulf %85, %87 : vector<4x32xf32>
    %91 = arith.addf %89, %90 : vector<4x32xf32>
    %92 = math.tanh %91 : vector<4x32xf32>
    %93 = arith.mulf %88, %92 : vector<4x32xf32>
    %c12_38 = arith.constant 12 : index
    %c0_39 = arith.constant 0 : index
    %94 = vector.load %arg12[%c12_38, %c0_39] : memref<32x32xf32, #tpu.memory_space<vmem>>, vector<4x32xf32>
    tpu.vector_store %arg12[%c12_38, %c0_39], %93 {strides = array<i32>} : memref<32x32xf32, #tpu.memory_space<vmem>>, vector<4x32xf32>,
    %c16 = arith.constant 16 : index
    %c0_40 = arith.constant 0 : index
    %95 = vector.load %arg11[%c16, %c0_40] : memref<32x128xf32, #tpu.memory_space<vmem>>, vector<4x128xf32>
    %cst_41 = arith.constant dense<0.000000e+00> : vector<4x128xf32>
    %96 = tpu.matmul %93, %18, %cst_41 {dimension_numbers = #tpu.dot_dimension_numbers<[1], [0], [0], [1], [0, 0, 1, 1], [], []>} : vector<4x32xf32>, vector<32x128xf32>, vector<4x128xf32> -> vector<4x128xf32>
    %97 = arith.addf %95, %96 : vector<4x128xf32>
    %98 = arith.negf %97 : vector<4x128xf32>
    %99 = math.exp %98 : vector<4x128xf32>
    %cst_42 = arith.constant 1.000000e+00 : f32
    %100 = vector.broadcast %cst_42 : f32 to vector<4x128xf32>
    %101 = arith.addf %100, %99 : vector<4x128xf32>
    %102 = arith.divf %100, %101 : vector<4x128xf32>
    %103 = math.tanh %97 : vector<4x128xf32>
    %104 = vector.extract_strided_slice %102 {offsets = [0, 0], sizes = [4, 32], strides = [1, 1]} : vector<4x128xf32> to vector<4x32xf32>
    %105 = vector.extract_strided_slice %102 {offsets = [0, 32], sizes = [4, 32], strides = [1, 1]} : vector<4x128xf32> to vector<4x32xf32>
    %106 = vector.extract_strided_slice %103 {offsets = [0, 64], sizes = [4, 32], strides = [1, 1]} : vector<4x128xf32> to vector<4x32xf32>
    %107 = vector.extract_strided_slice %102 {offsets = [0, 96], sizes = [4, 32], strides = [1, 1]} : vector<4x128xf32> to vector<4x32xf32>
    %108 = arith.mulf %105, %91 : vector<4x32xf32>
    %109 = arith.mulf %104, %106 : vector<4x32xf32>
    %110 = arith.addf %108, %109 : vector<4x32xf32>
    %111 = math.tanh %110 : vector<4x32xf32>
    %112 = arith.mulf %107, %111 : vector<4x32xf32>
    %c16_43 = arith.constant 16 : index
    %c0_44 = arith.constant 0 : index
    %113 = vector.load %arg12[%c16_43, %c0_44] : memref<32x32xf32, #tpu.memory_space<vmem>>, vector<4x32xf32>
    tpu.vector_store %arg12[%c16_43, %c0_44], %112 {strides = array<i32>} : memref<32x32xf32, #tpu.memory_space<vmem>>, vector<4x32xf32>,
    %c20 = arith.constant 20 : index
    %c0_45 = arith.constant 0 : index
    %114 = vector.load %arg11[%c20, %c0_45] : memref<32x128xf32, #tpu.memory_space<vmem>>, vector<4x128xf32>
    %cst_46 = arith.constant dense<0.000000e+00> : vector<4x128xf32>
    %115 = tpu.matmul %112, %18, %cst_46 {dimension_numbers = #tpu.dot_dimension_numbers<[1], [0], [0], [1], [0, 0, 1, 1], [], []>} : vector<4x32xf32>, vector<32x128xf32>, vector<4x128xf32> -> vector<4x128xf32>
    %116 = arith.addf %114, %115 : vector<4x128xf32>
    %117 = arith.negf %116 : vector<4x128xf32>
    %118 = math.exp %117 : vector<4x128xf32>
    %cst_47 = arith.constant 1.000000e+00 : f32
    %119 = vector.broadcast %cst_47 : f32 to vector<4x128xf32>
    %120 = arith.addf %119, %118 : vector<4x128xf32>
    %121 = arith.divf %119, %120 : vector<4x128xf32>
    %122 = math.tanh %116 : vector<4x128xf32>
    %123 = vector.extract_strided_slice %121 {offsets = [0, 0], sizes = [4, 32], strides = [1, 1]} : vector<4x128xf32> to vector<4x32xf32>
    %124 = vector.extract_strided_slice %121 {offsets = [0, 32], sizes = [4, 32], strides = [1, 1]} : vector<4x128xf32> to vector<4x32xf32>
    %125 = vector.extract_strided_slice %122 {offsets = [0, 64], sizes = [4, 32], strides = [1, 1]} : vector<4x128xf32> to vector<4x32xf32>
    %126 = vector.extract_strided_slice %121 {offsets = [0, 96], sizes = [4, 32], strides = [1, 1]} : vector<4x128xf32> to vector<4x32xf32>
    %127 = arith.mulf %124, %110 : vector<4x32xf32>
    %128 = arith.mulf %123, %125 : vector<4x32xf32>
    %129 = arith.addf %127, %128 : vector<4x32xf32>
    %130 = math.tanh %129 : vector<4x32xf32>
    %131 = arith.mulf %126, %130 : vector<4x32xf32>
    %c20_48 = arith.constant 20 : index
    %c0_49 = arith.constant 0 : index
    %132 = vector.load %arg12[%c20_48, %c0_49] : memref<32x32xf32, #tpu.memory_space<vmem>>, vector<4x32xf32>
    tpu.vector_store %arg12[%c20_48, %c0_49], %131 {strides = array<i32>} : memref<32x32xf32, #tpu.memory_space<vmem>>, vector<4x32xf32>,
    %c24 = arith.constant 24 : index
    %c0_50 = arith.constant 0 : index
    %133 = vector.load %arg11[%c24, %c0_50] : memref<32x128xf32, #tpu.memory_space<vmem>>, vector<4x128xf32>
    %cst_51 = arith.constant dense<0.000000e+00> : vector<4x128xf32>
    %134 = tpu.matmul %131, %18, %cst_51 {dimension_numbers = #tpu.dot_dimension_numbers<[1], [0], [0], [1], [0, 0, 1, 1], [], []>} : vector<4x32xf32>, vector<32x128xf32>, vector<4x128xf32> -> vector<4x128xf32>
    %135 = arith.addf %133, %134 : vector<4x128xf32>
    %136 = arith.negf %135 : vector<4x128xf32>
    %137 = math.exp %136 : vector<4x128xf32>
    %cst_52 = arith.constant 1.000000e+00 : f32
    %138 = vector.broadcast %cst_52 : f32 to vector<4x128xf32>
    %139 = arith.addf %138, %137 : vector<4x128xf32>
    %140 = arith.divf %138, %139 : vector<4x128xf32>
    %141 = math.tanh %135 : vector<4x128xf32>
    %142 = vector.extract_strided_slice %140 {offsets = [0, 0], sizes = [4, 32], strides = [1, 1]} : vector<4x128xf32> to vector<4x32xf32>
    %143 = vector.extract_strided_slice %140 {offsets = [0, 32], sizes = [4, 32], strides = [1, 1]} : vector<4x128xf32> to vector<4x32xf32>
    %144 = vector.extract_strided_slice %141 {offsets = [0, 64], sizes = [4, 32], strides = [1, 1]} : vector<4x128xf32> to vector<4x32xf32>
    %145 = vector.extract_strided_slice %140 {offsets = [0, 96], sizes = [4, 32], strides = [1, 1]} : vector<4x128xf32> to vector<4x32xf32>
    %146 = arith.mulf %143, %129 : vector<4x32xf32>
    %147 = arith.mulf %142, %144 : vector<4x32xf32>
    %148 = arith.addf %146, %147 : vector<4x32xf32>
    %149 = math.tanh %148 : vector<4x32xf32>
    %150 = arith.mulf %145, %149 : vector<4x32xf32>
    %c24_53 = arith.constant 24 : index
    %c0_54 = arith.constant 0 : index
    %151 = vector.load %arg12[%c24_53, %c0_54] : memref<32x32xf32, #tpu.memory_space<vmem>>, vector<4x32xf32>
    tpu.vector_store %arg12[%c24_53, %c0_54], %150 {strides = array<i32>} : memref<32x32xf32, #tpu.memory_space<vmem>>, vector<4x32xf32>,
    %c0_55 = arith.constant 0 : index
    %c0_56 = arith.constant 0 : index
    %152 = vector.load %arg12[%c0_55, %c0_56] : memref<32x32xf32, #tpu.memory_space<vmem>>, vector<32x32xf32>
    %c0_57 = arith.constant 0 : index
    %c0_58 = arith.constant 0 : index
    %153 = vector.load %arg8[%c0_57, %c0_58] : memref<32x40xf32, #tpu.memory_space<vmem>>, vector<32x40xf32>
    %cst_59 = arith.constant dense<0.000000e+00> : vector<32x40xf32>
    %154 = tpu.matmul %152, %153, %cst_59 {dimension_numbers = #tpu.dot_dimension_numbers<[1], [0], [0], [1], [0, 0, 1, 1], [], []>} : vector<32x32xf32>, vector<32x40xf32>, vector<32x40xf32> -> vector<32x40xf32>
    %c0_60 = arith.constant 0 : index
    %c0_61 = arith.constant 0 : index
    %155 = vector.load %arg9[%c0_60, %c0_61] : memref<1x40xf32, #tpu.memory_space<vmem>>, vector<1x40xf32>
    %156 = vector.broadcast %155 : vector<1x40xf32> to vector<32x40xf32>
    %157 = arith.addf %154, %156 : vector<32x40xf32>
    %cst_62 = arith.constant dense<0xFF800000> : vector<32xf32>
    %158 = vector.multi_reduction <maximumf>, %157, %cst_62 [1] : vector<32x40xf32> to vector<32xf32>
    %159 = vector.shape_cast %158 : vector<32xf32> to vector<32x1xf32>
    %160 = vector.broadcast %159 : vector<32x1xf32> to vector<32x40xf32>
    %161 = arith.subf %157, %160 : vector<32x40xf32>
    %162 = math.exp %161 : vector<32x40xf32>
    %cst_63 = arith.constant dense<0.000000e+00> : vector<32xf32>
    %163 = vector.multi_reduction <add>, %162, %cst_63 [1] : vector<32x40xf32> to vector<32xf32>
    %164 = vector.shape_cast %163 : vector<32xf32> to vector<32x1xf32>
    %165 = math.log %164 : vector<32x1xf32>
    %166 = vector.broadcast %165 : vector<32x1xf32> to vector<32x40xf32>
    %167 = arith.subf %161, %166 : vector<32x40xf32>
    %c0_64 = arith.constant 0 : index
    %c0_65 = arith.constant 0 : index
    %168 = vector.load %arg4[%c0_64, %c0_65] : memref<32x1xi32, #tpu.memory_space<vmem>>, vector<32x1xi32>
    %169 = tpu.iota {dimensions = array<i32: 1>} : vector<32x40xi32>
    %170 = vector.broadcast %168 : vector<32x1xi32> to vector<32x40xi32>
    %171 = arith.cmpi eq, %169, %170 : vector<32x40xi32>
    %cst_66 = arith.constant 0.000000e+00 : f32
    %172 = vector.broadcast %cst_66 : f32 to vector<32x40xf32>
    %173 = arith.select %171, %167, %172 : vector<32x40xi1>, vector<32x40xf32>
    %cst_67 = arith.constant dense<0.000000e+00> : vector<32xf32>
    %174 = vector.multi_reduction <add>, %173, %cst_67 [1] : vector<32x40xf32> to vector<32xf32>
    %175 = vector.shape_cast %174 : vector<32xf32> to vector<32x1xf32>
    %c0_i32 = arith.constant 0 : i32
    %176 = vector.broadcast %c0_i32 : i32 to vector<32x1xi32>
    %177 = arith.cmpi ne, %168, %176 : vector<32x1xi32>
    %cst_68 = arith.constant 0.000000e+00 : f32
    %178 = vector.broadcast %cst_68 : f32 to vector<32x1xf32>
    %179 = arith.subf %178, %175 : vector<32x1xf32>
    %cst_69 = arith.constant 0.000000e+00 : f32
    %180 = vector.broadcast %cst_69 : f32 to vector<32x1xf32>
    %181 = arith.select %177, %179, %180 : vector<32x1xi1>, vector<32x1xf32>
    %cst_70 = arith.constant dense<0.000000e+00> : vector<1xf32>
    %182 = vector.multi_reduction <add>, %181, %cst_70 [0] : vector<32x1xf32> to vector<1xf32>
    %183 = vector.shape_cast %182 : vector<1xf32> to vector<1x1xf32>
    %184 = arith.extui %177 : vector<32x1xi1> to vector<32x1xi32>
    %185 = arith.sitofp %184 : vector<32x1xi32> to vector<32x1xf32>
    %cst_71 = arith.constant dense<0.000000e+00> : vector<1xf32>
    %186 = vector.multi_reduction <add>, %185, %cst_71 [0] : vector<32x1xf32> to vector<1xf32>
    %187 = vector.shape_cast %186 : vector<1xf32> to vector<1x1xf32>
    %188 = arith.divf %183, %187 : vector<1x1xf32>
    %189 = tpu.concatenate %188, %187 in 1 : vector<1x1xf32>, vector<1x1xf32> -> vector<1x2xf32>
    %c0_72 = arith.constant 0 : index
    %c0_73 = arith.constant 0 : index
    %190 = vector.load %arg10[%c0_72, %c0_73] : memref<1x2xf32, #tpu.memory_space<vmem>>, vector<1x2xf32>
    tpu.vector_store %arg10[%c0_72, %c0_73], %189 {strides = array<i32>} : memref<1x2xf32, #tpu.memory_space<vmem>>, vector<1x2xf32>,
    return
  }
}

</mosaic_0001>

<llo_original>
// kernel: baseline_forward.1
$region0: #{baseline_forward.1}
  #allocation0 [shape = 'u32[]', space=smem, size = 0x4, offset = 0x4, fixed_abs, tag = 'smem constant byte address 0x4 - core index']
  #allocation1 [shape = 'u32[72,128]{1,0:T(1,128)}', space=vmem, size = 0x9000, scoped, tag = 'internal scratch']
  #allocation2 [shape = 'f32[32,128]{1,0:T(8,128)}', space=vmem, size = 0x4000, scoped, tag = 'scratch operand']
  #allocation3 [shape = 'f32[32,32]{1,0:T(8,128)}', space=vmem, size = 0x4000, scoped, tag = 'scratch operand']
  %s0 = inlined_call_operand.vmem [shape: f32[4,16], index: 0, kind: input, shape index: {}]
  %s1 = inlined_call_operand.vmem [shape: f32[16,64], index: 1, kind: input, shape index: {}]
  %s2 = inlined_call_operand.vmem [shape: f32[1,64], index: 2, kind: input, shape index: {}]
  %s3 = inlined_call_operand.vmem [shape: f32[32,16], index: 3, kind: input, shape index: {}]
  %s4 = inlined_call_operand.vmem [shape: s32[32,1], index: 4, kind: input, shape index: {}]
  %s5 = inlined_call_operand.vmem [shape: f32[16,128], index: 5, kind: input, shape index: {}]
  %s6 = inlined_call_operand.vmem [shape: f32[32,128], index: 6, kind: input, shape index: {}]
  %s7 = inlined_call_operand.vmem [shape: f32[1,128], index: 7, kind: input, shape index: {}]
  %s8 = inlined_call_operand.vmem [shape: f32[32,40], index: 8, kind: input, shape index: {}]
  %s9 = inlined_call_operand.vmem [shape: f32[1,40], index: 9, kind: input, shape index: {}]
  %s10 = inlined_call_operand.vmem [shape: f32[1,2], index: 10, kind: output, shape index: {}]
  %s11 = sld [smem:[#allocation0]]
  $region50: #{baseline_forward.1} parent=0
    _
  %s13 = ssub.s32 1, %s11
  %s14 = scalar_select 0, %s13, %s11
  // Predicated region
  $region2: #{baseline_forward.1} parent=0 // pred_check
    _
  $region3: #{baseline_forward.1} parent=0 // pred_check_branch
    %16 = sbr.rel (0) target = $region5
  $region4: #{baseline_forward.1} parent=0 // pred_region
    _
  $region5: #{baseline_forward.1} parent=0 // pred_fallthru
    _
  // Predicated region
  $region6: #{baseline_forward.1} parent=0 // pred_check
    _
  $region7: #{baseline_forward.1} parent=0 // pred_check_branch
    %18 = sbr.rel (0) target = $region9
  $region8: #{baseline_forward.1} parent=0 // pred_region
    _
  $region9: #{baseline_forward.1} parent=0 // pred_fallthru
    _
  // Predicated region
  $region10: #{baseline_forward.1} parent=0 // pred_check
    _
  $region11: #{baseline_forward.1} parent=0 // pred_check_branch
    %20 = sbr.rel (0) target = $region13
  $region12: #{baseline_forward.1} parent=0 // pred_region
    _
  $region13: #{baseline_forward.1} parent=0 // pred_fallthru
    _
  // Predicated region
  $region14: #{baseline_forward.1} parent=0 // pred_check
    _
  $region15: #{baseline_forward.1} parent=0 // pred_check_branch
    %22 = sbr.rel (0) target = $region17
  $region16: #{baseline_forward.1} parent=0 // pred_region
    _
  $region17: #{baseline_forward.1} parent=0 // pred_fallthru
    _
  // Predicated region
  $region18: #{baseline_forward.1} parent=0 // pred_check
    _
  $region19: #{baseline_forward.1} parent=0 // pred_check_branch
    %24 = sbr.rel (0) target = $region21
  $region20: #{baseline_forward.1} parent=0 // pred_region
    _
  $region21: #{baseline_forward.1} parent=0 // pred_fallthru
    _
  // Predicated region
  $region22: #{baseline_forward.1} parent=0 // pred_check
    _
  $region23: #{baseline_forward.1} parent=0 // pred_check_branch
    %26 = sbr.rel (0) target = $region25
  $region24: #{baseline_forward.1} parent=0 // pred_region
    _
  $region25: #{baseline_forward.1} parent=0 // pred_fallthru
    _
  // Predicated region
  $region26: #{baseline_forward.1} parent=0 // pred_check
    _
  $region27: #{baseline_forward.1} parent=0 // pred_check_branch
    %28 = sbr.rel (0) target = $region29
  $region28: #{baseline_forward.1} parent=0 // pred_region
    _
  $region29: #{baseline_forward.1} parent=0 // pred_fallthru
    _
  // Predicated region
  $region30: #{baseline_forward.1} parent=0 // pred_check
    _
  $region31: #{baseline_forward.1} parent=0 // pred_check_branch
    %30 = sbr.rel (0) target = $region33
  $region32: #{baseline_forward.1} parent=0 // pred_region
    _
  $region33: #{baseline_forward.1} parent=0 // pred_fallthru
    _
  // Predicated region
  $region34: #{baseline_forward.1} parent=0 // pred_check
    _
  $region35: #{baseline_forward.1} parent=0 // pred_check_branch
    %32 = sbr.rel (0) target = $region37
  $region36: #{baseline_forward.1} parent=0 // pred_region
    _
  $region37: #{baseline_forward.1} parent=0 // pred_fallthru
    _
  // Predicated region
  $region38: #{baseline_forward.1} parent=0 // pred_check
    _
  $region39: #{baseline_forward.1} parent=0 // pred_check_branch
    %34 = sbr.rel (0) target = $region41
  $region40: #{baseline_forward.1} parent=0 // pred_region
    _
  $region41: #{baseline_forward.1} parent=0 // pred_fallthru
    _
  %v35 = vld [vmem:[%s0] sm:$0xf]
  %v36 = vld [vmem:[%s1] sm:$0xff]
  %v37 = vld [vmem:[%s1 + $0x8] sm:$0xff]
  %v38 = vld [vmem:[%s2] sm:$0x1]
  %v40 = vperm.slane %v38, 0
  %vm42 = vcmask 130048
  %v44 = vsel %vm42, %v35, 0
  %46 = vmatpush.msra.mxu0 0.0
  %47 = vmatpush.msra.mxu0 0.0
  %48 = vmatpush.msra.mxu0 0.0
  %49 = vmatpush.msra.mxu0 0.0
  %50 = vmatpush.msra.mxu0 0.0
  %51 = vmatpush.msra.mxu0 0.0
  %52 = vmatpush.msra.mxu0 0.0
  %53 = vmatpush.msra.mxu0 0.0
  %54 = vmatpush.msra.mxu0 0.0
  %55 = vmatpush.msra.mxu0 0.0
  %56 = vmatpush.msra.mxu0 0.0
  %57 = vmatpush.msra.mxu0 0.0
  %58 = vmatpush.msra.mxu0 0.0
  %59 = vmatpush.msra.mxu0 0.0
  %60 = vmatpush.msra.mxu0 %v37
  %61 = vmatpush.msra.mxu0 %v36
  %62 = vmatmul.f32.gmra.mxu0 %v44
  %v63 = vpop.f32.mrf.mxu0
  %v64 = vadd.f32 %v40, %v63
  %65 = vdwg.mxu0
  %v66 = vtanh.pop %v64
  %v67 = vld [vmem:[%s3] sm:$0xff]
  %v68 = vld [vmem:[%s3 + $0x8] sm:$0xff]
  %v69 = vld [vmem:[%s3 + $0x10] sm:$0xff]
  %v70 = vld [vmem:[%s3 + $0x18] sm:$0xff]
  %v71 = vld [vmem:[%s5] sm:$0xff]
  %v72 = vld [vmem:[%s5 + $0x8] sm:$0xff]
  %v73 = vld [vmem:[%s7] sm:$0x1]
  %v75 = vperm.slane %v73, 0
  %v78 = vsel %vm42, %v67, 0
  %v81 = vsel %vm42, %v68, 0
  %v84 = vsel %vm42, %v69, 0
  %v87 = vsel %vm42, %v70, 0
  %89 = vmatpush.msra.mxu0 0.0
  %90 = vmatpush.msra.mxu0 0.0
  %91 = vmatpush.msra.mxu0 0.0
  %92 = vmatpush.msra.mxu0 0.0
  %93 = vmatpush.msra.mxu0 0.0
  %94 = vmatpush.msra.mxu0 0.0
  %95 = vmatpush.msra.mxu0 0.0
  %96 = vmatpush.msra.mxu0 0.0
  %97 = vmatpush.msra.mxu0 0.0
  %98 = vmatpush.msra.mxu0 0.0
  %99 = vmatpush.msra.mxu0 0.0
  %100 = vmatpush.msra.mxu0 0.0
  %101 = vmatpush.msra.mxu0 0.0
  %102 = vmatpush.msra.mxu0 0.0
  %103 = vmatpush.msra.mxu0 %v72
  %104 = vmatpush.msra.mxu0 %v71
  %105 = vmatmul.f32.gmra.mxu0 %v78
  %v106 = vpop.f32.mrf.mxu0
  %v107 = vadd.f32 %v75, %v106
  %108 = vmatmul.f32.gmra.mxu0 %v81
  %v109 = vpop.f32.mrf.mxu0
  %v110 = vadd.f32 %v75, %v109
  %111 = vmatmul.f32.gmra.mxu0 %v84
  %v112 = vpop.f32.mrf.mxu0
  %v113 = vadd.f32 %v75, %v112
  %114 = vmatmul.f32.gmra.mxu0 %v87
  %v115 = vpop.f32.mrf.mxu0
  %v116 = vadd.f32 %v75, %v115
  %117 = vdwg.mxu0
  %118 = vst [vmem:[#allocation2] sm:$0xff] %v107
  %119 = vst [vmem:[#allocation2 + $0x8] sm:$0xff] %v110
  %120 = vst [vmem:[#allocation2 + $0x10] sm:$0xff] %v113
  %121 = vst [vmem:[#allocation2 + $0x18] sm:$0xff] %v116
  %vm122 = vcmask 261120
  %123 = vst.msk [vmem:[#allocation3] sm:$0xff] %vm122, 0.0
  %124 = vst.msk [vmem:[#allocation3 + $0x8] sm:$0xff] %vm122, 0.0
  %125 = vst.msk [vmem:[#allocation3 + $0x10] sm:$0xff] %vm122, 0.0
  %126 = vst.msk [vmem:[#allocation3 + $0x18] sm:$0xff] %vm122, 0.0
  %v127 = vld [vmem:[%s6] sm:$0xff]
  %v128 = vld [vmem:[%s6 + $0x8] sm:$0xff]
  %v129 = vld [vmem:[%s6 + $0x10] sm:$0xff]
  %v130 = vld [vmem:[%s6 + $0x18] sm:$0xff]
  %v131 = vld [vmem:[#allocation2] sm:$0xf]
  %v133 = vsel %vm122, %v66, 0
  %135 = vmatpush.msra.mxu0 0.0
  %136 = vmatpush.msra.mxu0 0.0
  %137 = vmatpush.msra.mxu0 0.0
  %138 = vmatpush.msra.mxu0 0.0
  %139 = vmatpush.msra.mxu0 0.0
  %140 = vmatpush.msra.mxu0 0.0
  %141 = vmatpush.msra.mxu0 0.0
  %142 = vmatpush.msra.mxu0 0.0
  %143 = vmatpush.msra.mxu0 0.0
  %144 = vmatpush.msra.mxu0 0.0
  %145 = vmatpush.msra.mxu0 0.0
  %146 = vmatpush.msra.mxu0 0.0
  %147 = vmatpush.msra.mxu0 %v130
  %148 = vmatpush.msra.mxu0 %v129
  %149 = vmatpush.msra.mxu0 %v128
  %150 = vmatpush.msra.mxu0 %v127
  %151 = vmatmul.f32.gmra.mxu0 %v133
  %v152 = vpop.f32.mrf.mxu0
  %v153 = vadd.f32 0.0, %v152
  %154 = vdwg.mxu0
  %v155 = vadd.f32 %v131, %v153
  %v156 = vxor.u32 %v155, 2147483648
  %v157 = vmul.f32 %v156, 1.442695
  %v158 = vpow.pop %v157
  %v159 = vadd.f32 %v158, 1.0
  %v160 = vrcp.pop %v159
  %v161 = vmul.f32 %v159, %v160
  %v162 = vsub.f32 1.0, %v161
  %v163 = vmul.f32 %v160, %v162
  %v164 = vadd.f32 %v160, %v163
  %vm165 = vweird.f32 %v159
  %vm166 = vweird.f32 %v160
  %vm167 = vmor %vm165, %vm166
  %v168 = vsel %vm167, %v160, %v164
  %v169 = vand.u32 2147483647, %v159
  %vm170 = vcmp.eq.f32.partialorder %v169, 8.507059e+37
  %v171 = vand.u32 %v159, 2147483648
  %v172 = vor.u32 1.1754944e-38, %v171
  %v173 = vsel %vm170, %v172, %v168
  %v174 = vmul.f32 1.0, %v173
  %v175 = vtanh.pop %v155
  %v176 = vmul.f32 %v174, %v66
  %178 = vrot.lane.b32.xlu0 %v175, 64
  %v179 = vpop.permute.xlu0 %178
  %v181 = vmul.f32 %v174, %v179
  %183 = vrot.lane.b32.xlu0 %v181, 32
  %v184 = vpop.permute.xlu0 %183
  %v186 = vadd.f32 %v176, %v184
  %v187 = vtanh.pop %v186
  %189 = vrot.lane.b32.xlu0 %v187, 64
  %v190 = vpop.permute.xlu0 %189
  %v192 = vmul.f32 %v174, %v190
  %194 = vrot.lane.b32.xlu0 %v192, 32
  %v195 = vpop.permute.xlu0 %194
  %vm197 = vcmask 257024
  %198 = vst.msk [vmem:[#allocation3] sm:$0xf] %vm197, %v195
  %v199 = vld [vmem:[#allocation2 + $0x4] sm:$0xf]
  %v200 = vsel %vm122, %v195, 0
  %202 = vmatpush.msra.mxu0 0.0
  %203 = vmatpush.msra.mxu0 0.0
  %204 = vmatpush.msra.mxu0 0.0
  %205 = vmatpush.msra.mxu0 0.0
  %206 = vmatpush.msra.mxu0 0.0
  %207 = vmatpush.msra.mxu0 0.0
  %208 = vmatpush.msra.mxu0 0.0
  %209 = vmatpush.msra.mxu0 0.0
  %210 = vmatpush.msra.mxu0 0.0
  %211 = vmatpush.msra.mxu0 0.0
  %212 = vmatpush.msra.mxu0 0.0
  %213 = vmatpush.msra.mxu0 0.0
  %214 = vmatpush.msra.mxu0 %v130
  %215 = vmatpush.msra.mxu0 %v129
  %216 = vmatpush.msra.mxu0 %v128
  %217 = vmatpush.msra.mxu0 %v127
  %218 = vmatmul.f32.gmra.mxu0 %v200
  %v219 = vpop.f32.mrf.mxu0
  %v220 = vadd.f32 0.0, %v219
  %221 = vdwg.mxu0
  %v222 = vadd.f32 %v199, %v220
  %v223 = vxor.u32 %v222, 2147483648
  %v224 = vmul.f32 %v223, 1.442695
  %v225 = vpow.pop %v224
  %v226 = vadd.f32 %v225, 1.0
  %v227 = vrcp.pop %v226
  %v228 = vmul.f32 %v226, %v227
  %v229 = vsub.f32 1.0, %v228
  %v230 = vmul.f32 %v227, %v229
  %v231 = vadd.f32 %v227, %v230
  %vm232 = vweird.f32 %v226
  %vm233 = vweird.f32 %v227
  %vm234 = vmor %vm232, %vm233
  %v235 = vsel %vm234, %v227, %v231
  %v236 = vand.u32 2147483647, %v226
  %vm237 = vcmp.eq.f32.partialorder %v236, 8.507059e+37
  %v238 = vand.u32 %v226, 2147483648
  %v239 = vor.u32 1.1754944e-38, %v238
  %v240 = vsel %vm237, %v239, %v235
  %v241 = vmul.f32 1.0, %v240
  %v242 = vtanh.pop %v222
  %v243 = vmul.f32 %v241, %v186
  %245 = vrot.lane.b32.xlu0 %v242, 64
  %v246 = vpop.permute.xlu0 %245
  %v248 = vmul.f32 %v241, %v246
  %250 = vrot.lane.b32.xlu0 %v248, 32
  %v251 = vpop.permute.xlu0 %250
  %v253 = vadd.f32 %v243, %v251
  %v254 = vtanh.pop %v253
  %256 = vrot.lane.b32.xlu0 %v254, 64
  %v257 = vpop.permute.xlu0 %256
  %v259 = vmul.f32 %v241, %v257
  %261 = vrot.lane.b32.xlu0 %v259, 32
  %v262 = vpop.permute.xlu0 %261
  %264 = vst.msk [vmem:[#allocation3 + $0x4] sm:$0xf] %vm197, %v262
  %v265 = vld [vmem:[#allocation2 + $0x8] sm:$0xf]
  %v266 = vsel %vm122, %v262, 0
  %268 = vmatpush.msra.mxu0 0.0
  %269 = vmatpush.msra.mxu0 0.0
  %270 = vmatpush.msra.mxu0 0.0
  %271 = vmatpush.msra.mxu0 0.0
  %272 = vmatpush.msra.mxu0 0.0
  %273 = vmatpush.msra.mxu0 0.0
  %274 = vmatpush.msra.mxu0 0.0
  %275 = vmatpush.msra.mxu0 0.0
  %276 = vmatpush.msra.mxu0 0.0
  %277 = vmatpush.msra.mxu0 0.0
  %278 = vmatpush.msra.mxu0 0.0
  %279 = vmatpush.msra.mxu0 0.0
  %280 = vmatpush.msra.mxu0 %v130
  %281 = vmatpush.msra.mxu0 %v129
  %282 = vmatpush.msra.mxu0 %v128
  %283 = vmatpush.msra.mxu0 %v127
  %284 = vmatmul.f32.gmra.mxu0 %v266
  %v285 = vpop.f32.mrf.mxu0
  %v286 = vadd.f32 0.0, %v285
  %287 = vdwg.mxu0
  %v288 = vadd.f32 %v265, %v286
  %v289 = vxor.u32 %v288, 2147483648
  %v290 = vmul.f32 %v289, 1.442695
  %v291 = vpow.pop %v290
  %v292 = vadd.f32 %v291, 1.0
  %v293 = vrcp.pop %v292
  %v294 = vmul.f32 %v292, %v293
  %v295 = vsub.f32 1.0, %v294
  %v296 = vmul.f32 %v293, %v295
  %v297 = vadd.f32 %v293, %v296
  %vm298 = vweird.f32 %v292
  %vm299 = vweird.f32 %v293
  %vm300 = vmor %vm298, %vm299
  %v301 = vsel %vm300, %v293, %v297
  %v302 = vand.u32 2147483647, %v292
  %vm303 = vcmp.eq.f32.partialorder %v302, 8.507059e+37
  %v304 = vand.u32 %v292, 2147483648
  %v305 = vor.u32 1.1754944e-38, %v304
  %v306 = vsel %vm303, %v305, %v301
  %v307 = vmul.f32 1.0, %v306
  %v308 = vtanh.pop %v288
  %v309 = vmul.f32 %v307, %v253
  %311 = vrot.lane.b32.xlu0 %v308, 64
  %v312 = vpop.permute.xlu0 %311
  %v314 = vmul.f32 %v307, %v312
  %316 = vrot.lane.b32.xlu0 %v314, 32
  %v317 = vpop.permute.xlu0 %316
  %v319 = vadd.f32 %v309, %v317
  %v320 = vtanh.pop %v319
  %322 = vrot.lane.b32.xlu0 %v320, 64
  %v323 = vpop.permute.xlu0 %322
  %v325 = vmul.f32 %v307, %v323
  %327 = vrot.lane.b32.xlu0 %v325, 32
  %v328 = vpop.permute.xlu0 %327
  %330 = vst.msk [vmem:[#allocation3 + $0x8] sm:$0xf] %vm197, %v328
  %v331 = vld [vmem:[#allocation2 + $0xc] sm:$0xf]
  %v332 = vsel %vm122, %v328, 0
  %334 = vmatpush.msra.mxu0 0.0
  %335 = vmatpush.msra.mxu0 0.0
  %336 = vmatpush.msra.mxu0 0.0
  %337 = vmatpush.msra.mxu0 0.0
  %338 = vmatpush.msra.mxu0 0.0
  %339 = vmatpush.msra.mxu0 0.0
  %340 = vmatpush.msra.mxu0 0.0
  %341 = vmatpush.msra.mxu0 0.0
  %342 = vmatpush.msra.mxu0 0.0
  %343 = vmatpush.msra.mxu0 0.0
  %344 = vmatpush.msra.mxu0 0.0
  %345 = vmatpush.msra.mxu0 0.0
  %346 = vmatpush.msra.mxu0 %v130
  %347 = vmatpush.msra.mxu0 %v129
  %348 = vmatpush.msra.mxu0 %v128
  %349 = vmatpush.msra.mxu0 %v127
  %350 = vmatmul.f32.gmra.mxu0 %v332
  %v351 = vpop.f32.mrf.mxu0
  %v352 = vadd.f32 0.0, %v351
  %353 = vdwg.mxu0
  %v354 = vadd.f32 %v331, %v352
  %v355 = vxor.u32 %v354, 2147483648
  %v356 = vmul.f32 %v355, 1.442695
  %v357 = vpow.pop %v356
  %v358 = vadd.f32 %v357, 1.0
  %v359 = vrcp.pop %v358
  %v360 = vmul.f32 %v358, %v359
  %v361 = vsub.f32 1.0, %v360
  %v362 = vmul.f32 %v359, %v361
  %v363 = vadd.f32 %v359, %v362
  %vm364 = vweird.f32 %v358
  %vm365 = vweird.f32 %v359
  %vm366 = vmor %vm364, %vm365
  %v367 = vsel %vm366, %v359, %v363
  %v368 = vand.u32 2147483647, %v358
  %vm369 = vcmp.eq.f32.partialorder %v368, 8.507059e+37
  %v370 = vand.u32 %v358, 2147483648
  %v371 = vor.u32 1.1754944e-38, %v370
  %v372 = vsel %vm369, %v371, %v367
  %v373 = vmul.f32 1.0, %v372
  %v374 = vtanh.pop %v354
  %v375 = vmul.f32 %v373, %v319
  %377 = vrot.lane.b32.xlu0 %v374, 64
  %v378 = vpop.permute.xlu0 %377
  %v380 = vmul.f32 %v373, %v378
  %382 = vrot.lane.b32.xlu0 %v380, 32
  %v383 = vpop.permute.xlu0 %382
  %v385 = vadd.f32 %v375, %v383
  %v386 = vtanh.pop %v385
  %388 = vrot.lane.b32.xlu0 %v386, 64
  %v389 = vpop.permute.xlu0 %388
  %v391 = vmul.f32 %v373, %v389
  %393 = vrot.lane.b32.xlu0 %v391, 32
  %v394 = vpop.permute.xlu0 %393
  %396 = vst.msk [vmem:[#allocation3 + $0xc] sm:$0xf] %vm197, %v394
  %v397 = vld [vmem:[#allocation2 + $0x10] sm:$0xf]
  %v398 = vsel %vm122, %v394, 0
  %400 = vmatpush.msra.mxu0 0.0
  %401 = vmatpush.msra.mxu0 0.0
  %402 = vmatpush.msra.mxu0 0.0
  %403 = vmatpush.msra.mxu0 0.0
  %404 = vmatpush.msra.mxu0 0.0
  %405 = vmatpush.msra.mxu0 0.0
  %406 = vmatpush.msra.mxu0 0.0
  %407 = vmatpush.msra.mxu0 0.0
  %408 = vmatpush.msra.mxu0 0.0
  %409 = vmatpush.msra.mxu0 0.0
  %410 = vmatpush.msra.mxu0 0.0
  %411 = vmatpush.msra.mxu0 0.0
  %412 = vmatpush.msra.mxu0 %v130
  %413 = vmatpush.msra.mxu0 %v129
  %414 = vmatpush.msra.mxu0 %v128
  %415 = vmatpush.msra.mxu0 %v127
  %416 = vmatmul.f32.gmra.mxu0 %v398
  %v417 = vpop.f32.mrf.mxu0
  %v418 = vadd.f32 0.0, %v417
  %419 = vdwg.mxu0
  %v420 = vadd.f32 %v397, %v418
  %v421 = vxor.u32 %v420, 2147483648
  %v422 = vmul.f32 %v421, 1.442695
  %v423 = vpow.pop %v422
  %v424 = vadd.f32 %v423, 1.0
  %v425 = vrcp.pop %v424
  %v426 = vmul.f32 %v424, %v425
  %v427 = vsub.f32 1.0, %v426
  %v428 = vmul.f32 %v425, %v427
  %v429 = vadd.f32 %v425, %v428
  %vm430 = vweird.f32 %v424
  %vm431 = vweird.f32 %v425
  %vm432 = vmor %vm430, %vm431
  %v433 = vsel %vm432, %v425, %v429
  %v434 = vand.u32 2147483647, %v424
  %vm435 = vcmp.eq.f32.partialorder %v434, 8.507059e+37
  %v436 = vand.u32 %v424, 2147483648
  %v437 = vor.u32 1.1754944e-38, %v436
  %v438 = vsel %vm435, %v437, %v433
  %v439 = vmul.f32 1.0, %v438
  %v440 = vtanh.pop %v420
  %v441 = vmul.f32 %v439, %v385
  %443 = vrot.lane.b32.xlu0 %v440, 64
  %v444 = vpop.permute.xlu0 %443
  %v446 = vmul.f32 %v439, %v444
  %448 = vrot.lane.b32.xlu0 %v446, 32
  %v449 = vpop.permute.xlu0 %448
  %v451 = vadd.f32 %v441, %v449
  %v452 = vtanh.pop %v451
  %454 = vrot.lane.b32.xlu0 %v452, 64
  %v455 = vpop.permute.xlu0 %454
  %v457 = vmul.f32 %v439, %v455
  %459 = vrot.lane.b32.xlu0 %v457, 32
  %v460 = vpop.permute.xlu0 %459
  %462 = vst.msk [vmem:[#allocation3 + $0x10] sm:$0xf] %vm197, %v460
  %v463 = vld [vmem:[#allocation2 + $0x14] sm:$0xf]
  %v464 = vsel %vm122, %v460, 0
  %466 = vmatpush.msra.mxu0 0.0
  %467 = vmatpush.msra.mxu0 0.0
  %468 = vmatpush.msra.mxu0 0.0
  %469 = vmatpush.msra.mxu0 0.0
  %470 = vmatpush.msra.mxu0 0.0
  %471 = vmatpush.msra.mxu0 0.0
  %472 = vmatpush.msra.mxu0 0.0
  %473 = vmatpush.msra.mxu0 0.0
  %474 = vmatpush.msra.mxu0 0.0
  %475 = vmatpush.msra.mxu0 0.0
  %476 = vmatpush.msra.mxu0 0.0
  %477 = vmatpush.msra.mxu0 0.0
  %478 = vmatpush.msra.mxu0 %v130
  %479 = vmatpush.msra.mxu0 %v129
  %480 = vmatpush.msra.mxu0 %v128
  %481 = vmatpush.msra.mxu0 %v127
  %482 = vmatmul.f32.gmra.mxu0 %v464
  %v483 = vpop.f32.mrf.mxu0
  %v484 = vadd.f32 0.0, %v483
  %485 = vdwg.mxu0
  %v486 = vadd.f32 %v463, %v484
  %v487 = vxor.u32 %v486, 2147483648
  %v488 = vmul.f32 %v487, 1.442695
  %v489 = vpow.pop %v488
  %v490 = vadd.f32 %v489, 1.0
  %v491 = vrcp.pop %v490
  %v492 = vmul.f32 %v490, %v491
  %v493 = vsub.f32 1.0, %v492
  %v494 = vmul.f32 %v491, %v493
  %v495 = vadd.f32 %v491, %v494
  %vm496 = vweird.f32 %v490
  %vm497 = vweird.f32 %v491
  %vm498 = vmor %vm496, %vm497
  %v499 = vsel %vm498, %v491, %v495
  %v500 = vand.u32 2147483647, %v490
  %vm501 = vcmp.eq.f32.partialorder %v500, 8.507059e+37
  %v502 = vand.u32 %v490, 2147483648
  %v503 = vor.u32 1.1754944e-38, %v502
  %v504 = vsel %vm501, %v503, %v499
  %v505 = vmul.f32 1.0, %v504
  %v506 = vtanh.pop %v486
  %v507 = vmul.f32 %v505, %v451
  %509 = vrot.lane.b32.xlu0 %v506, 64
  %v510 = vpop.permute.xlu0 %509
  %v512 = vmul.f32 %v505, %v510
  %514 = vrot.lane.b32.xlu0 %v512, 32
  %v515 = vpop.permute.xlu0 %514
  %v517 = vadd.f32 %v507, %v515
  %v518 = vtanh.pop %v517
  %520 = vrot.lane.b32.xlu0 %v518, 64
  %v521 = vpop.permute.xlu0 %520
  %v523 = vmul.f32 %v505, %v521
  %525 = vrot.lane.b32.xlu0 %v523, 32
  %v526 = vpop.permute.xlu0 %525
  %528 = vst.msk [vmem:[#allocation3 + $0x14] sm:$0xf] %vm197, %v526
  %v529 = vld [vmem:[#allocation2 + $0x18] sm:$0xf]
  %v530 = vsel %vm122, %v526, 0
  %532 = vmatpush.msra.mxu0 0.0
  %533 = vmatpush.msra.mxu0 0.0
  %534 = vmatpush.msra.mxu0 0.0
  %535 = vmatpush.msra.mxu0 0.0
  %536 = vmatpush.msra.mxu0 0.0
  %537 = vmatpush.msra.mxu0 0.0
  %538 = vmatpush.msra.mxu0 0.0
  %539 = vmatpush.msra.mxu0 0.0
  %540 = vmatpush.msra.mxu0 0.0
  %541 = vmatpush.msra.mxu0 0.0
  %542 = vmatpush.msra.mxu0 0.0
  %543 = vmatpush.msra.mxu0 0.0
  %544 = vmatpush.msra.mxu0 %v130
  %545 = vmatpush.msra.mxu0 %v129
  %546 = vmatpush.msra.mxu0 %v128
  %547 = vmatpush.msra.mxu0 %v127
  %548 = vmatmul.f32.gmra.mxu0 %v530
  %v549 = vpop.f32.mrf.mxu0
  %v550 = vadd.f32 0.0, %v549
  %551 = vdwg.mxu0
  %v552 = vadd.f32 %v529, %v550
  %v553 = vxor.u32 %v552, 2147483648
  %v554 = vmul.f32 %v553, 1.442695
  %v555 = vpow.pop %v554
  %v556 = vadd.f32 %v555, 1.0
  %v557 = vrcp.pop %v556
  %v558 = vmul.f32 %v556, %v557
  %v559 = vsub.f32 1.0, %v558
  %v560 = vmul.f32 %v557, %v559
  %v561 = vadd.f32 %v557, %v560
  %vm562 = vweird.f32 %v556
  %vm563 = vweird.f32 %v557
  %vm564 = vmor %vm562, %vm563
  %v565 = vsel %vm564, %v557, %v561
  %v566 = vand.u32 2147483647, %v556
  %vm567 = vcmp.eq.f32.partialorder %v566, 8.507059e+37
  %v568 = vand.u32 %v556, 2147483648
  %v569 = vor.u32 1.1754944e-38, %v568
  %v570 = vsel %vm567, %v569, %v565
  %v571 = vmul.f32 1.0, %v570
  %v572 = vtanh.pop %v552
  %v573 = vmul.f32 %v571, %v517
  %575 = vrot.lane.b32.xlu0 %v572, 64
  %v576 = vpop.permute.xlu0 %575
  %v578 = vmul.f32 %v571, %v576
  %580 = vrot.lane.b32.xlu0 %v578, 32
  %v581 = vpop.permute.xlu0 %580
  %v583 = vadd.f32 %v573, %v581
  %v584 = vtanh.pop %v583
  %586 = vrot.lane.b32.xlu0 %v584, 64
  %v587 = vpop.permute.xlu0 %586
  %v589 = vmul.f32 %v571, %v587
  %591 = vrot.lane.b32.xlu0 %v589, 32
  %v592 = vpop.permute.xlu0 %591
  %594 = vst.msk [vmem:[#allocation3 + $0x18] sm:$0xf] %vm197, %v592
  %v595 = vld [vmem:[#allocation3] sm:$0xff]
  %v596 = vld [vmem:[#allocation3 + $0x8] sm:$0xff]
  %v597 = vld [vmem:[#allocation3 + $0x10] sm:$0xff]
  %v598 = vld [vmem:[#allocation3 + $0x18] sm:$0xff]
  %v599 = vld [vmem:[%s8] sm:$0xff]
  %v600 = vld [vmem:[%s8 + $0x8] sm:$0xff]
  %v601 = vld [vmem:[%s8 + $0x10] sm:$0xff]
  %v602 = vld [vmem:[%s8 + $0x18] sm:$0xff]
  %v603 = vld [vmem:[%s9] sm:$0x1]
  %v605 = vperm.slane %v603, 0
  %v608 = vsel %vm122, %v595, 0
  %v611 = vsel %vm122, %v596, 0
  %v614 = vsel %vm122, %v597, 0
  %v617 = vsel %vm122, %v598, 0
  %619 = vmatpush.msra.mxu0 0.0
  %620 = vmatpush.msra.mxu0 0.0
  %621 = vmatpush.msra.mxu0 0.0
  %622 = vmatpush.msra.mxu0 0.0
  %623 = vmatpush.msra.mxu0 0.0
  %624 = vmatpush.msra.mxu0 0.0
  %625 = vmatpush.msra.mxu0 0.0
  %626 = vmatpush.msra.mxu0 0.0
  %627 = vmatpush.msra.mxu0 0.0
  %628 = vmatpush.msra.mxu0 0.0
  %629 = vmatpush.msra.mxu0 0.0
  %630 = vmatpush.msra.mxu0 0.0
  %631 = vmatpush.msra.mxu0 %v602
  %632 = vmatpush.msra.mxu0 %v601
  %633 = vmatpush.msra.mxu0 %v600
  %634 = vmatpush.msra.mxu0 %v599
  %635 = vmatmul.f32.gmra.mxu0 %v608
  %v636 = vpop.f32.mrf.mxu0
  %v637 = vadd.f32 %v605, %v636
  %638 = vmatmul.f32.gmra.mxu0 %v611
  %v639 = vpop.f32.mrf.mxu0
  %v640 = vadd.f32 %v605, %v639
  %641 = vmatmul.f32.gmra.mxu0 %v614
  %v642 = vpop.f32.mrf.mxu0
  %v643 = vadd.f32 %v605, %v642
  %644 = vmatmul.f32.gmra.mxu0 %v617
  %v645 = vpop.f32.mrf.mxu0
  %v646 = vadd.f32 %v605, %v645
  %647 = vdwg.mxu0
  %vm648 = vcmask 326656
  %v649 = vsel %vm648, %v637, -inf
  %650 = vmax.xlane.f32.xlu0 %v649
  %v651 = vpop.xlane.xlu0 %650
  %v652 = vsel %vm648, %v640, -inf
  %653 = vmax.xlane.f32.xlu0 %v652
  %v654 = vpop.xlane.xlu0 %653
  %v655 = vsel %vm648, %v643, -inf
  %656 = vmax.xlane.f32.xlu0 %v655
  %v657 = vpop.xlane.xlu0 %656
  %v658 = vsel %vm648, %v646, -inf
  %659 = vmax.xlane.f32.xlu0 %v658
  %v660 = vpop.xlane.xlu0 %659
  %v661 = vsub.f32 %v637, %v651
  %v662 = vsub.f32 %v640, %v654
  %v663 = vsub.f32 %v643, %v657
  %v664 = vsub.f32 %v646, %v660
  %v665 = vmul.f32 %v661, 1.442695
  %v666 = vpow.pop %v665
  %v667 = vmul.f32 %v662, 1.442695
  %v668 = vpow.pop %v667
  %v669 = vmul.f32 %v663, 1.442695
  %v670 = vpow.pop %v669
  %v671 = vmul.f32 %v664, 1.442695
  %v672 = vpow.pop %v671
  %v673 = vsel %vm648, %v666, 0.0
  %674 = vadd.xlane.f32.xlu0 %v673
  %v675 = vpop.xlane.xlu0 %674
  %v676 = vsel %vm648, %v668, 0.0
  %677 = vadd.xlane.f32.xlu0 %v676
  %v678 = vpop.xlane.xlu0 %677
  %v679 = vsel %vm648, %v670, 0.0
  %680 = vadd.xlane.f32.xlu0 %v679
  %v681 = vpop.xlane.xlu0 %680
  %v682 = vsel %vm648, %v672, 0.0
  %683 = vadd.xlane.f32.xlu0 %v682
  %v684 = vpop.xlane.xlu0 %683
  %v685 = vlog2.pop %v675
  %v686 = vmul.f32 %v685, 0.6931472
  %v687 = vlog2.pop %v678
  %v688 = vmul.f32 %v687, 0.6931472
  %v689 = vlog2.pop %v681
  %v690 = vmul.f32 %v689, 0.6931472
  %v691 = vlog2.pop %v684
  %v692 = vmul.f32 %v691, 0.6931472
  %v693 = vsub.f32 %v661, %v686
  %v694 = vsub.f32 %v662, %v688
  %v695 = vsub.f32 %v663, %v690
  %v696 = vsub.f32 %v664, %v692
  %v697 = vld [vmem:[%s4] sm:$0xff]
  %v698 = vld [vmem:[%s4 + $0x8] sm:$0xff]
  %v699 = vld [vmem:[%s4 + $0x10] sm:$0xff]
  %v700 = vld [vmem:[%s4 + $0x18] sm:$0xff]
  %v701 = vlaneseq
  %v702 = vand.u32 %v701, 127
  %703 = vset.pattern.permute.xlu0 0
  %704 = vperm.xlu0 %703, %v697
  %v705 = vpop.permute.xlu0 %704
  %706 = vset.pattern.permute.xlu0 0
  %707 = vperm.xlu0 %706, %v698
  %v708 = vpop.permute.xlu0 %707
  %709 = vset.pattern.permute.xlu0 0
  %710 = vperm.xlu0 %709, %v699
  %v711 = vpop.permute.xlu0 %710
  %712 = vset.pattern.permute.xlu0 0
  %713 = vperm.xlu0 %712, %v700
  %v714 = vpop.permute.xlu0 %713
  %vm715 = vcmp.eq.s32.totalorder %v702, %v705
  %vm716 = vcmp.eq.s32.totalorder %v702, %v708
  %vm717 = vcmp.eq.s32.totalorder %v702, %v711
  %vm718 = vcmp.eq.s32.totalorder %v702, %v714
  %v719 = vsel %vm715, %v693, 0.0
  %v720 = vsel %vm716, %v694, 0.0
  %v721 = vsel %vm717, %v695, 0.0
  %v722 = vsel %vm718, %v696, 0.0
  %v723 = vsel %vm648, %v719, 0.0
  %724 = vadd.xlane.f32.xlu0 %v723
  %v725 = vpop.xlane.xlu0 %724
  %v726 = vsel %vm648, %v720, 0.0
  %727 = vadd.xlane.f32.xlu0 %v726
  %v728 = vpop.xlane.xlu0 %727
  %v729 = vsel %vm648, %v721, 0.0
  %730 = vadd.xlane.f32.xlu0 %v729
  %v731 = vpop.xlane.xlu0 %730
  %v732 = vsel %vm648, %v722, 0.0
  %733 = vadd.xlane.f32.xlu0 %v732
  %v734 = vpop.xlane.xlu0 %733
  %vm735 = vcmp.ne.s32.totalorder %v697, 0
  %vm736 = vcmp.ne.s32.totalorder %v698, 0
  %vm737 = vcmp.ne.s32.totalorder %v699, 0
  %vm738 = vcmp.ne.s32.totalorder %v700, 0
  %v739 = vsub.f32 0.0, %v725
  %v740 = vsub.f32 0.0, %v728
  %v741 = vsub.f32 0.0, %v731
  %v742 = vsub.f32 0.0, %v734
  %v743 = vsel %vm735, %v739, 0.0
  %v744 = vsel %vm736, %v740, 0.0
  %v745 = vsel %vm737, %v741, 0.0
  %v746 = vsel %vm738, %v742, 0.0
  %vm747 = vcmask 7168
  %v748 = vsel %vm747, %v743, 0.0
  %v749 = vsel %vm747, %v744, 0.0
  %v750 = vadd.f32 %v748, %v749
  %v751 = vsel %vm747, %v745, 0.0
  %v752 = vadd.f32 %v750, %v751
  %v753 = vsel %vm747, %v746, 0.0
  %v754 = vadd.f32 %v752, %v753
  %v755 = vrot.slane %v754, 4
  %v756 = vadd.f32 %v754, %v755
  %v757 = vrot.slane %v756, 2
  %v758 = vadd.f32 %v756, %v757
  %v759 = vrot.slane %v758, 1
  %v760 = vadd.f32 %v758, %v759
  %v761 = vsel %vm735, 1, 0
  %v762 = vsel %vm736, 1, 0
  %v763 = vsel %vm737, 1, 0
  %v764 = vsel %vm738, 1, 0
  %v765 = vcvt.s32.f32 %v761
  %v766 = vcvt.s32.f32 %v762
  %v767 = vcvt.s32.f32 %v763
  %v768 = vcvt.s32.f32 %v764
  %v769 = vsel %vm747, %v765, 0.0
  %v770 = vsel %vm747, %v766, 0.0
  %v771 = vadd.f32 %v769, %v770
  %v772 = vsel %vm747, %v767, 0.0
  %v773 = vadd.f32 %v771, %v772
  %v774 = vsel %vm747, %v768, 0.0
  %v775 = vadd.f32 %v773, %v774
  %v776 = vrot.slane %v775, 4
  %v777 = vadd.f32 %v775, %v776
  %v778 = vrot.slane %v777, 2
  %v779 = vadd.f32 %v777, %v778
  %v780 = vrot.slane %v779, 1
  %v781 = vadd.f32 %v779, %v780
  %v782 = vrcp.pop %v781
  %v783 = vmul.f32 %v781, %v782
  %v784 = vsub.f32 1.0, %v783
  %v785 = vmul.f32 %v782, %v784
  %v786 = vadd.f32 %v782, %v785
  %vm787 = vweird.f32 %v781
  %vm788 = vweird.f32 %v782
  %vm789 = vmor %vm787, %vm788
  %v790 = vsel %vm789, %v782, %v786
  %v791 = vand.u32 2147483647, %v781
  %vm792 = vcmp.eq.f32.partialorder %v791, 8.507059e+37
  %v793 = vand.u32 %v781, 2147483648
  %v794 = vor.u32 1.1754944e-38, %v793
  %v795 = vsel %vm792, %v794, %v790
  %v796 = vmul.f32 %v760, %v795
  %798 = vrot.lane.b32.xlu0 %v781, 1
  %v799 = vpop.permute.xlu0 %798
  %v801 = vsel %vm747, %v796, %v799
  %vm802 = vcmask 8192
  %803 = vst.msk [vmem:[%s10] sm:$0x1] %vm802, %v801
  // Predicated region
  $region42: #{baseline_forward.1} parent=0 // pred_check
    _
  $region43: #{baseline_forward.1} parent=0 // pred_check_branch
    %805 = sbr.rel (0) target = $region45
  $region44: #{baseline_forward.1} parent=0 // pred_region
    _
  $region45: #{baseline_forward.1} parent=0 // pred_fallthru
    _
  // Predicated region
  $region46: #{baseline_forward.1} parent=0 // pred_check
    _
  $region47: #{baseline_forward.1} parent=0 // pred_check_branch
    %807 = sbr.rel (0) target = $region49
  $region48: #{baseline_forward.1} parent=0 // pred_region
    _
  $region49: #{baseline_forward.1} parent=0 // pred_fallthru
    _

</llo_original>
